<compile_context>
chip_gen: v7x
topology: tpu7x:2x2x1
jax: 0.10.0
libtpu: 0.0.40
codegen_flags: <defaults>
</compile_context>

<pallas_src>
import math

import jax
import jax.numpy as jnp
from jax import lax
from jax.experimental import pallas as pl
from jax.experimental.pallas import tpu as pltpu


def _round_up(x, m):
    return ((x + m - 1) // m) * m


def _make_ue_feedback_kernel(Np, nV, pack_w, inv_norm):
    def kernel(h_re_ref, h_im_ref, vmat_ref, vt_ref, out_ref):
        BB = h_re_ref.shape[0]

        # He = H @ Q for Q = eye(Na, Np) * inv_norm  ==>  first Np antennas of H.
        # inv_norm is folded into cqi below (argmax is scale-invariant).
        he_re = h_re_ref[:, :Np]                       # (BB, Np)
        he_im = h_im_ref[:, :Np]                       # (BB, Np)

        # prod = He @ V as a fused real-embedding matmul:
        #   [pr_re | pr_im] = he_re @ [Vr | Vi] + he_im @ [-Vi | Vr]
        pr = (jnp.dot(he_re, vmat_ref[:Np, :], preferred_element_type=jnp.float32)
              + jnp.dot(he_im, vmat_ref[Np:, :], preferred_element_type=jnp.float32))
        pr_re = pr[:, :nV]
        pr_im = pr[:, nV:]
        s2 = pr_re * pr_re + pr_im * pr_im             # |prod|^2, (BB, nV)

        # m = argmax(|prod|) == argmax(|prod|^2), first-max-index semantics.
        mx = jnp.max(s2, axis=1, keepdims=True)                      # (BB, 1)
        iota = lax.broadcasted_iota(jnp.int32, s2.shape, 1)          # (BB, nV)
        masked = jnp.where(s2 >= mx, iota, nV)
        m_idx = jnp.min(masked, axis=1, keepdims=True)               # (BB, 1) int32
        # NOTE: if a row of s2 is all-NaN, m_idx becomes nV (out of range) and
        # the one-hot gather below returns v = 0 (same behaviour as before).

        # cqi = |He_normalized @ v| = inv_norm * sqrt(max |He_raw @ V|^2)
        cqi = inv_norm * jnp.sqrt(mx)                                # (BB, 1)

        # v = V[:, m].T via one-hot matmul against lane-padded V^T; the result
        # is already the lane-dense output slab [v_re | v_im | 0 ...].
        onehot = (iota == m_idx).astype(jnp.float32)                 # (BB, nV)
        packed = jnp.dot(onehot, vt_ref[...],
                         preferred_element_type=jnp.float32)         # (BB, pack_w)

        # splice cqi and m (stored as exact-in-f32 integer) into their lanes
        lane = lax.broadcasted_iota(jnp.int32, (BB, pack_w), 1)
        packed = jnp.where(lane == 2 * Np, cqi, packed)
        packed = jnp.where(lane == 2 * Np + 1, m_idx.astype(jnp.float32), packed)

        out_ref[...] = packed                                        # one lane-dense store

    return kernel


def csi_cell_forward(H_flat, V_c, *, Na, Np, batch_tile=8):
    """CSICell.forward hot path (Q=None, q_mod='eye').

    H_flat: (B, 2*Na) float32, interleaved (re, im) pairs (view_as_complex layout).
    V_c   : (Np, nV) complex64 codebook.
    Returns (Q, p, cqi, m, v).
    """
    B = H_flat.shape[0]
    nV = V_c.shape[1]
    inv_norm = 1.0 / math.sqrt(float(min(Na, Np)))   # 1 / ||eye(Na, Np)||_F

    # deinterleave H -> real / imag planes, (B, Na) each (layout plumbing)
    Hri = H_flat.reshape(B, Na, 2).astype(jnp.float32)
    h_re = Hri[..., 0]
    h_im = Hri[..., 1]

    # batch tile (multiple of 8 sublanes); pad B up.  For v7x keep the grid
    # length >= 2 when B is large so both TensorCores are used.
    BB = max(8, (int(batch_tile) // 8) * 8)
    B_pad = _round_up(B, BB)
    if B_pad != B:
        h_re = jnp.pad(h_re, ((0, B_pad - B), (0, 0)))
        h_im = jnp.pad(h_im, ((0, B_pad - B), (0, 0)))

    # codebook packing (constants, built once in the wrapper)
    v_re = jnp.real(V_c).astype(jnp.float32)               # (Np, nV)
    v_im = jnp.imag(V_c).astype(jnp.float32)
    vmat = jnp.concatenate(
        [jnp.concatenate([v_re, v_im], axis=1),
         jnp.concatenate([-v_im, v_re], axis=1)], axis=0)   # (2Np, 2nV)

    pack_w = max(128, _round_up(2 * Np + 2, 128))
    vt = jnp.concatenate([v_re.T, v_im.T], axis=1)          # (nV, 2Np)
    vt = jnp.pad(vt, ((0, 0), (0, pack_w - 2 * Np)))        # (nV, pack_w)

    # TODO(synk): bf16 operand casting (v6e/v7x MXU) once Na/Np/nV/B scale up;
    #             kept f32 here for exactness at toy sizes.
    kernel = _make_ue_feedback_kernel(Np, nV, pack_w, inv_norm)

    packed = pl.pallas_call(
        kernel,
        out_shape=jax.ShapeDtypeStruct((B_pad, pack_w), jnp.float32),
        grid_spec=pltpu.PrefetchScalarGridSpec(
            num_scalar_prefetch=0,
            grid=(B_pad // BB,),
            in_specs=[
                pl.BlockSpec((BB, Na), lambda b: (b, 0)),        # h_re
                pl.BlockSpec((BB, Na), lambda b: (b, 0)),        # h_im
                pl.BlockSpec((2 * Np, 2 * nV), lambda b: (0, 0)),  # real-embedded V
                pl.BlockSpec((nV, pack_w), lambda b: (0, 0)),    # lane-padded V^T
            ],
            out_specs=pl.BlockSpec((BB, pack_w), lambda b: (b, 0)),
        ),
        compiler_params=pltpu.CompilerParams(
            dimension_semantics=("parallel",)),
    )(h_re, h_im, vmat, vt)

    packed = packed[:B]
    v = (packed[:, :Np] + 1j * packed[:, Np:2 * Np]).astype(jnp.complex64)  # (B, Np)
    cqi = packed[:, 2 * Np]                                                 # (B,)
    m = packed[:, 2 * Np + 1].astype(jnp.int32)                             # (B,) exact (< 2^24)

    # Q and p in closed form for q_mod='eye' (batch-invariant / structured).
    Q = jnp.broadcast_to((jnp.eye(Na, Np) * inv_norm).astype(jnp.complex64),
                         (B, Na, Np))
    if Np <= Na:
        p = (inv_norm * jnp.pad(v, ((0, 0), (0, Na - Np))))[:, :, None]     # (B, Na, 1)
    else:
        p = (inv_norm * v[:, :Na])[:, :, None]

    # TODO(synk): quantizer.apply(cqi, 'None') — LinearQuantizer is not defined in the
    #             reference source; treated as identity here.
    # TODO(synk): self.cell (AttenCell), Q_fc, csi_fc, basis heads are undefined in the
    #             reference; Q_next / dec_hcs / csi_next / R are not produced.
    return Q, p, cqi, m, v


if __name__ == "__main__":
    B, Na, Np, nV, hidden = 2, 32, 8, 128, 32
    key = jax.random.PRNGKey(0)
    k1, k2, k3, k4 = jax.random.split(key, 4)

    # Deterministic synthetic inputs / parameters.
    H_flat = jax.random.normal(k1, (B, 2 * Na), dtype=jnp.float32)
    V_c = (jax.random.normal(k2, (Np, nV), dtype=jnp.float32)
           + 1j * jax.random.normal(k3, (Np, nV), dtype=jnp.float32)).astype(jnp.complex64)
    Q_param = jax.random.normal(k4, (Na, Na, 2), dtype=jnp.float32)  # nn.Parameter; unused for q_mod='eye'

    Q, p, cqi, m, v = jax.block_until_ready(csi_cell_forward(H_flat, V_c, Na=Na, Np=Np))

    # Pure-JAX reference of the same math for a correctness check.
    Hc = H_flat.reshape(B, Na, 2)
    Hc = (Hc[..., 0] + 1j * Hc[..., 1])[:, None, :].astype(jnp.complex64)   # (B,1,Na)
    Qe = jnp.broadcast_to(jnp.eye(Na, Np, dtype=jnp.complex64), (B, Na, Np))
    Qe = Qe / jnp.linalg.norm(Qe, axis=(-2, -1), keepdims=True)
    He = Hc @ Qe                                                            # (B,1,Np)
    prod = jnp.abs(He @ V_c)[:, 0, :]                                       # (B,nV)
    m_ref = jnp.argmax(prod, axis=1)
    v_ref = V_c[:, m_ref].T                                                 # (B,Np)
    cqi_ref = jnp.abs(jnp.einsum('bp,bp->b', He[:, 0, :], v_ref))
    p_ref = Qe @ v_ref[:, :, None]                                          # (B,Na,1)

    assert jnp.array_equal(m, m_ref.astype(jnp.int32))
    assert jnp.allclose(cqi, cqi_ref, rtol=1e-3, atol=1e-3)
    assert jnp.allclose(v, v_ref, rtol=1e-3, atol=1e-3)
    assert jnp.allclose(p, p_ref, rtol=1e-3, atol=1e-3)
    assert jnp.allclose(Q, Qe, rtol=1e-3, atol=1e-3)

    print("KERNEL_OK")
</pallas_src>

<mosaic_0001>
module attributes {stable_mosaic.version = 11 : i64} {
  func.func @kernel(%arg0: i32, %arg1: memref<8x32xf32, #tpu.memory_space<vmem>>, %arg2: memref<8x32xf32, #tpu.memory_space<vmem>>, %arg3: memref<16x256xf32, #tpu.memory_space<vmem>>, %arg4: memref<128x128xf32, #tpu.memory_space<vmem>>, %arg5: memref<8x128xf32, #tpu.memory_space<vmem>>) attributes {dimension_semantics = [#tpu.dimension_semantics<parallel>], iteration_bounds = array<i64: 1>, scalar_prefetch = 0 : i64, scratch_operands = 0 : i64, tpu.core_type = #tpu.core_type<tc>, window_params = [{transform_indices = @transform_0, window_bounds = array<i64: 8, 32>}, {transform_indices = @transform_1, window_bounds = array<i64: 8, 32>}, {pipeline_mode = #tpu.pipeline_mode<synchronous>, transform_indices = @transform_2, window_bounds = array<i64: 16, 256>}, {pipeline_mode = #tpu.pipeline_mode<synchronous>, transform_indices = @transform_3, window_bounds = array<i64: 128, 128>}, {transform_indices = @transform_4, window_bounds = array<i64: 8, 128>}]} {
    %c0 = arith.constant 0 : index
    %c0_0 = arith.constant 0 : index
    %0 = vector.load %arg1[%c0, %c0_0] : memref<8x32xf32, #tpu.memory_space<vmem>>, vector<8x8xf32>
    %c0_1 = arith.constant 0 : index
    %c0_2 = arith.constant 0 : index
    %1 = vector.load %arg2[%c0_1, %c0_2] : memref<8x32xf32, #tpu.memory_space<vmem>>, vector<8x8xf32>
    %c0_3 = arith.constant 0 : index
    %c0_4 = arith.constant 0 : index
    %2 = vector.load %arg3[%c0_3, %c0_4] : memref<16x256xf32, #tpu.memory_space<vmem>>, vector<8x256xf32>
    %cst = arith.constant dense<0.000000e+00> : vector<8x256xf32>
    %3 = tpu.matmul %0, %2, %cst {dimension_numbers = #tpu.dot_dimension_numbers<[1], [0], [0], [1], [0, 0, 1, 1], [], []>} : vector<8x8xf32>, vector<8x256xf32>, vector<8x256xf32> -> vector<8x256xf32>
    %c8 = arith.constant 8 : index
    %c0_5 = arith.constant 0 : index
    %4 = vector.load %arg3[%c8, %c0_5] : memref<16x256xf32, #tpu.memory_space<vmem>>, vector<8x256xf32>
    %cst_6 = arith.constant dense<0.000000e+00> : vector<8x256xf32>
    %5 = tpu.matmul %1, %4, %cst_6 {dimension_numbers = #tpu.dot_dimension_numbers<[1], [0], [0], [1], [0, 0, 1, 1], [], []>} : vector<8x8xf32>, vector<8x256xf32>, vector<8x256xf32> -> vector<8x256xf32>
    %6 = arith.addf %3, %5 : vector<8x256xf32>
    %7 = vector.extract_strided_slice %6 {offsets = [0, 0], sizes = [8, 128], strides = [1, 1]} : vector<8x256xf32> to vector<8x128xf32>
    %8 = vector.extract_strided_slice %6 {offsets = [0, 128], sizes = [8, 128], strides = [1, 1]} : vector<8x256xf32> to vector<8x128xf32>
    %9 = arith.mulf %7, %7 : vector<8x128xf32>
    %10 = arith.mulf %8, %8 : vector<8x128xf32>
    %11 = arith.addf %9, %10 : vector<8x128xf32>
    %cst_7 = arith.constant dense<0xFF800000> : vector<8xf32>
    %12 = vector.multi_reduction <maximumf>, %11, %cst_7 [1] : vector<8x128xf32> to vector<8xf32>
    %13 = vector.shape_cast %12 : vector<8xf32> to vector<8x1xf32>
    %14 = tpu.iota {dimensions = array<i32: 1>} : vector<8x128xi32>
    %15 = vector.broadcast %13 : vector<8x1xf32> to vector<8x128xf32>
    %16 = arith.cmpf oge, %11, %15 : vector<8x128xf32>
    %c128_i32 = arith.constant 128 : i32
    %17 = vector.broadcast %c128_i32 : i32 to vector<8x128xi32>
    %18 = arith.select %16, %14, %17 : vector<8x128xi1>, vector<8x128xi32>
    %cst_8 = arith.constant dense<2147483647> : vector<8xi32>
    %19 = vector.multi_reduction <minsi>, %18, %cst_8 [1] : vector<8x128xi32> to vector<8xi32>
    %20 = vector.shape_cast %19 : vector<8xi32> to vector<8x1xi32>
    %21 = math.sqrt %13 : vector<8x1xf32>
    %cst_9 = arith.constant 0.353553385 : f32
    %22 = vector.broadcast %cst_9 : f32 to vector<8x1xf32>
    %23 = arith.mulf %22, %21 : vector<8x1xf32>
    %24 = vector.broadcast %20 : vector<8x1xi32> to vector<8x128xi32>
    %25 = arith.cmpi eq, %14, %24 : vector<8x128xi32>
    %26 = arith.extui %25 : vector<8x128xi1> to vector<8x128xi32>
    %27 = arith.sitofp %26 : vector<8x128xi32> to vector<8x128xf32>
    %c0_10 = arith.constant 0 : index
    %c0_11 = arith.constant 0 : index
    %28 = vector.load %arg4[%c0_10, %c0_11] : memref<128x128xf32, #tpu.memory_space<vmem>>, vector<128x128xf32>
    %cst_12 = arith.constant dense<0.000000e+00> : vector<8x128xf32>
    %29 = tpu.matmul %27, %28, %cst_12 {dimension_numbers = #tpu.dot_dimension_numbers<[1], [0], [0], [1], [0, 0, 1, 1], [], []>} : vector<8x128xf32>, vector<128x128xf32>, vector<8x128xf32> -> vector<8x128xf32>
    %30 = tpu.iota {dimensions = array<i32: 1>} : vector<8x128xi32>
    %c16_i32 = arith.constant 16 : i32
    %31 = vector.broadcast %c16_i32 : i32 to vector<8x128xi32>
    %32 = arith.cmpi eq, %30, %31 : vector<8x128xi32>
    %33 = vector.shape_cast %23 : vector<8x1xf32> to vector<8x1xf32>
    %34 = vector.broadcast %33 : vector<8x1xf32> to vector<8x128xf32>
    %35 = arith.select %32, %34, %29 : vector<8x128xi1>, vector<8x128xf32>
    %c17_i32 = arith.constant 17 : i32
    %36 = vector.broadcast %c17_i32 : i32 to vector<8x128xi32>
    %37 = arith.cmpi eq, %30, %36 : vector<8x128xi32>
    %38 = arith.sitofp %20 : vector<8x1xi32> to vector<8x1xf32>
    %39 = vector.shape_cast %38 : vector<8x1xf32> to vector<8x1xf32>
    %40 = vector.broadcast %39 : vector<8x1xf32> to vector<8x128xf32>
    %41 = arith.select %37, %40, %35 : vector<8x128xi1>, vector<8x128xf32>
    %c0_13 = arith.constant 0 : index
    %c0_14 = arith.constant 0 : index
    %42 = vector.load %arg5[%c0_13, %c0_14] : memref<8x128xf32, #tpu.memory_space<vmem>>, vector<8x128xf32>
    tpu.vector_store %arg5[%c0_13, %c0_14], %41 {strides = array<i32>} : memref<8x128xf32, #tpu.memory_space<vmem>>, vector<8x128xf32>,
    return
  }
  func.func @transform_0(%arg0: i32) -> (i32, i32) {
    %c0_i32 = arith.constant 0 : i32
    %c0_i32_0 = arith.constant 0 : i32
    return %arg0, %c0_i32 : i32, i32
  }
  func.func @transform_1(%arg0: i32) -> (i32, i32) {
    %c0_i32 = arith.constant 0 : i32
    %c0_i32_0 = arith.constant 0 : i32
    return %arg0, %c0_i32 : i32, i32
  }
  func.func @transform_2(%arg0: i32) -> (i32, i32) {
    %c0_i32 = arith.constant 0 : i32
    %c0_i32_0 = arith.constant 0 : i32
    %c0_i32_1 = arith.constant 0 : i32
    return %c0_i32, %c0_i32_0 : i32, i32
  }
  func.func @transform_3(%arg0: i32) -> (i32, i32) {
    %c0_i32 = arith.constant 0 : i32
    %c0_i32_0 = arith.constant 0 : i32
    %c0_i32_1 = arith.constant 0 : i32
    return %c0_i32, %c0_i32_0 : i32, i32
  }
  func.func @transform_4(%arg0: i32) -> (i32, i32) {
    %c0_i32 = arith.constant 0 : i32
    %c0_i32_0 = arith.constant 0 : i32
    return %arg0, %c0_i32 : i32, i32
  }
}

</mosaic_0001>

<llo_original>
// kernel: tpu_custom_call.1
$region0: #{tpu_custom_call.1}
  #allocation0 [shape = 'u32[]', space=smem, size = 0x4, offset = 0x4, fixed_abs, tag = 'smem constant byte address 0x4 - core index']
  #allocation1 [shape = 'u32[144,128]{1,0:T(1,128)}', space=vmem, size = 0x12000, scoped, tag = 'internal scratch']
  %s0 = inlined_call_operand.hbm [shape: f32[8,32], index: 0, kind: input, shape index: {}]
  %s1 = inlined_call_operand.hbm [shape: f32[8,32], index: 1, kind: input, shape index: {}]
  %s2 = inlined_call_operand.hbm [shape: f32[16,256], index: 2, kind: input, shape index: {}]
  %s3 = inlined_call_operand.hbm [shape: f32[128,128], index: 3, kind: input, shape index: {}]
  %s4 = inlined_call_operand.hbm [shape: f32[8,128], index: 4, kind: output, shape index: {}]
  %s5 = sld [smem:[#allocation0]]
  $region42: #{tpu_custom_call.1} parent=0
    _
  %s7 = ssub.s32 1, %s5
  %s8 = scalar_select 0, %s7, %s5
  $region1: #{tpu_custom_call.1} parent=0
    #allocation2 [shape = 'u8[4096]{0}', space=vmem, size = 0x1000, scoped, tag = 'input window, operand 0, single buffered']
    #allocation3 [shape = 's32[1]{0}', space=sflag, size = 0x4, scoped, tag = 'scoped memory for tpu_custom_call.1']
    #allocation4 [shape = 's32[1]{0}', space=sflag, size = 0x4, scoped, tag = 'scoped memory for tpu_custom_call.1']
    #allocation5 [shape = 'u8[4096]{0}', space=vmem, size = 0x1000, scoped, tag = 'input window, operand 1, single buffered']
    #allocation6 [shape = 's32[1]{0}', space=sflag, size = 0x4, scoped, tag = 'scoped memory for tpu_custom_call.1']
    #allocation7 [shape = 'u8[16384]{0}', space=vmem, size = 0x4000, scoped, tag = 'input window, operand 2, single buffered']
    #allocation8 [shape = 'u8[65536]{0}', space=vmem, size = 0x10000, scoped, tag = 'input window, operand 3, single buffered']
    #allocation9 [shape = 's32[1]{0}', space=sflag, size = 0x4, scoped, tag = 'scoped memory for tpu_custom_call.1']
    #allocation10 [shape = 'u8[4096]{0}', space=vmem, size = 0x1000, scoped, tag = 'output window, operand 0, single buffered']
    %9 = vsyncpa [#allocation3], 0
    %10 = vsyncpa [#allocation6], 0
    %11 = vsyncpa [#allocation9], 0
    %12 = vsyncpa [#allocation4], 0
    // Predicated region
    $region2: #{tpu_custom_call.1} parent=1 // pred_check
      _
    $region3: #{tpu_custom_call.1} parent=1 // pred_check_branch
      %14 = sbr.rel (0) target = $region5
    $region4: #{tpu_custom_call.1} parent=1 // pred_region
      %s16 = ssub.s32 128, 128
      %17 = vsyncadd [#allocation3], %s16
      %s19 = sshll.u32 [#allocation2], 4
      %s20 = int_to_ptr.vmem [resolvable:$true] %s19
      %22 = dma.hbm_to_vmem [thread:$0]  %s0, 128, %s20, [#allocation3]
    $region5: #{tpu_custom_call.1} parent=1 // pred_fallthru
      _
    // Predicated region
    $region6: #{tpu_custom_call.1} parent=1 // pred_check
      _
    $region7: #{tpu_custom_call.1} parent=1 // pred_check_branch
      %24 = sbr.rel (0) target = $region9
    $region8: #{tpu_custom_call.1} parent=1 // pred_region
      %s26 = ssub.s32 128, 128
      %27 = vsyncadd [#allocation6], %s26
      %s29 = sshll.u32 [#allocation5], 4
      %s30 = int_to_ptr.vmem [resolvable:$true] %s29
      %32 = dma.hbm_to_vmem [thread:$0]  %s1, 128, %s30, [#allocation6]
    $region9: #{tpu_custom_call.1} parent=1 // pred_fallthru
      _
    // Predicated region
    $region10: #{tpu_custom_call.1} parent=1 // pred_check
      _
    $region11: #{tpu_custom_call.1} parent=1 // pred_check_branch
      %34 = sbr.rel (0) target = $region13
    $region12: #{tpu_custom_call.1} parent=1 // pred_region
      %s36 = ssub.s32 512, 512
      %37 = vsyncadd [#allocation6], %s36
      %s38 = sshll.u32 [#allocation7], 4
      %s39 = int_to_ptr.vmem [resolvable:$true] %s38
      %44 = dma.hbm_to_vmem [thread:$0]  %s2, 512, %s39, [#allocation6], 256, 256, 16
    $region13: #{tpu_custom_call.1} parent=1 // pred_fallthru
      _
    // Predicated region
    $region14: #{tpu_custom_call.1} parent=1 // pred_check
      _
    $region15: #{tpu_custom_call.1} parent=1 // pred_check_branch
      %46 = sbr.rel (0) target = $region17
    $region16: #{tpu_custom_call.1} parent=1 // pred_region
      %s48 = ssub.s32 2048, 2048
      %49 = vsyncadd [#allocation9], %s48
      %s50 = sshll.u32 [#allocation8], 4
      %s51 = int_to_ptr.vmem [resolvable:$true] %s50
      %56 = dma.hbm_to_vmem [thread:$0]  %s3, 2048, %s51, [#allocation9], 128, 128, 8
    $region17: #{tpu_custom_call.1} parent=1 // pred_fallthru
      _
    // Predicated region
    $region18: #{tpu_custom_call.1} parent=1 // pred_check
      _
    $region19: #{tpu_custom_call.1} parent=1 // pred_check_branch
      %58 = sbr.rel (0) target = $region21
    $region20: #{tpu_custom_call.1} parent=1 // pred_region
      %59 = dma.done [#allocation3], 128
    $region21: #{tpu_custom_call.1} parent=1 // pred_fallthru
      _
    // Predicated region
    $region22: #{tpu_custom_call.1} parent=1 // pred_check
      _
    $region23: #{tpu_custom_call.1} parent=1 // pred_check_branch
      %61 = sbr.rel (0) target = $region25
    $region24: #{tpu_custom_call.1} parent=1 // pred_region
      %62 = dma.done [#allocation6], 128
    $region25: #{tpu_custom_call.1} parent=1 // pred_fallthru
      _
    // Predicated region
    $region26: #{tpu_custom_call.1} parent=1 // pred_check
      _
    $region27: #{tpu_custom_call.1} parent=1 // pred_check_branch
      %64 = sbr.rel (0) target = $region29
    $region28: #{tpu_custom_call.1} parent=1 // pred_region
      %65 = dma.done [#allocation6], 512
    $region29: #{tpu_custom_call.1} parent=1 // pred_fallthru
      _
    // Predicated region
    $region30: #{tpu_custom_call.1} parent=1 // pred_check
      _
    $region31: #{tpu_custom_call.1} parent=1 // pred_check_branch
      %67 = sbr.rel (0) target = $region33
    $region32: #{tpu_custom_call.1} parent=1 // pred_region
      %68 = dma.done [#allocation9], 2048
    $region33: #{tpu_custom_call.1} parent=1 // pred_fallthru
      _
    %v69 = vld [vmem:[#allocation2] sm:$0xff]
    %v70 = vld [vmem:[#allocation5] sm:$0xff]
    %v71 = vld [vmem:[#allocation7] sm:$0xff]
    %v72 = vld [vmem:[#allocation7 + $0x8] sm:$0xff]
    %v73 = vld [vmem:[#allocation7 + $0x10] sm:$0xff]
    %v74 = vld [vmem:[#allocation7 + $0x18] sm:$0xff]
    %vm75 = vcmask 64512
    %v77 = vsel %vm75, %v70, 0
    %79 = vmatprep.subr.mxu0 %v74
    %80 = vmatpush1.msra.mxu0 %v73
    %81 = vmatprep.subr.mxu0 0.0
    %82 = vmatpush1.msra.mxu0 0.0
    %83 = vmatprep.subr.mxu0 0.0
    %84 = vmatpush1.msra.mxu0 0.0
    %85 = vmatprep.subr.mxu0 0.0
    %86 = vmatpush1.msra.mxu0 0.0
    %87 = vmatprep.subr.mxu0 0.0
    %88 = vmatpush1.msra.mxu0 0.0
    %89 = vmatprep.subr.mxu0 0.0
    %90 = vmatpush1.msra.mxu0 0.0
    %91 = vmatprep.subr.mxu0 0.0
    %92 = vmatpush1.msra.mxu0 0.0
    %93 = vmatprep.subr.mxu0 0.0
    %94 = vmatpush1.msra.mxu0 0.0
    %95 = vmatprep.subr.mxu0 0.0
    %96 = vmatpush1.msra.mxu0 0.0
    %97 = vmatprep.subr.mxu0 0.0
    %98 = vmatpush1.msra.mxu0 0.0
    %99 = vmatprep.subr.mxu0 0.0
    %100 = vmatpush1.msra.mxu0 0.0
    %101 = vmatprep.subr.mxu0 0.0
    %102 = vmatpush1.msra.mxu0 0.0
    %103 = vmatprep.subr.mxu0 0.0
    %104 = vmatpush1.msra.mxu0 0.0
    %105 = vmatprep.subr.mxu0 0.0
    %106 = vmatpush1.msra.mxu0 0.0
    %107 = vmatprep.subr.mxu0 0.0
    %108 = vmatpush1.msra.mxu0 0.0
    %109 = vmatprep.subr.mxu0 0.0
    %110 = vmatpush1.msra.mxu0 0.0
    %111 = vmatprep.subr.mxu0 0.0
    %112 = vmatpush1.msra.mxu0 0.0
    %113 = vmatprep.subr.mxu0 0.0
    %114 = vmatpush1.msra.mxu0 0.0
    %115 = vmatprep.subr.mxu0 0.0
    %116 = vmatpush1.msra.mxu0 0.0
    %117 = vmatprep.subr.mxu0 0.0
    %118 = vmatpush1.msra.mxu0 0.0
    %119 = vmatprep.subr.mxu0 0.0
    %120 = vmatpush1.msra.mxu0 0.0
    %121 = vmatprep.subr.mxu0 0.0
    %122 = vmatpush1.msra.mxu0 0.0
    %123 = vmatprep.subr.mxu0 0.0
    %124 = vmatpush1.msra.mxu0 0.0
    %125 = vmatprep.subr.mxu0 0.0
    %126 = vmatpush1.msra.mxu0 0.0
    %127 = vmatprep.subr.mxu0 0.0
    %128 = vmatpush1.msra.mxu0 0.0
    %129 = vmatprep.subr.mxu0 0.0
    %130 = vmatpush1.msra.mxu0 0.0
    %131 = vmatprep.subr.mxu0 0.0
    %132 = vmatpush1.msra.mxu0 0.0
    %133 = vmatprep.subr.mxu0 0.0
    %134 = vmatpush1.msra.mxu0 0.0
    %135 = vmatprep.subr.mxu0 0.0
    %136 = vmatpush1.msra.mxu0 0.0
    %137 = vmatprep.subr.mxu0 0.0
    %138 = vmatpush1.msra.mxu0 0.0
    %139 = vmatprep.subr.mxu0 0.0
    %140 = vmatpush1.msra.mxu0 0.0
    %141 = vmatprep.subr.mxu0 0.0
    %142 = vmatpush1.msra.mxu0 0.0
    %143 = vmatprep.mubr.f32.mxu0 0.0
    %144 = vmatmul.mubr.f32.gmra.mrb[0].mxu0 %v77
    %v145 = vpop.f32.mrb[0].mxu0
    %v146 = vadd.f32 0.0, %v145
    %v147 = vpop.f32.mrb[0].mxu0
    %v148 = vadd.f32 0.0, %v147
    %149 = vdwg.mxu0
    %v151 = vsel %vm75, %v69, 0
    %153 = vmatprep.subr.mxu0 %v72
    %154 = vmatpush1.msra.mxu0 %v71
    %155 = vmatprep.subr.mxu0 0.0
    %156 = vmatpush1.msra.mxu0 0.0
    %157 = vmatprep.subr.mxu0 0.0
    %158 = vmatpush1.msra.mxu0 0.0
    %159 = vmatprep.subr.mxu0 0.0
    %160 = vmatpush1.msra.mxu0 0.0
    %161 = vmatprep.subr.mxu0 0.0
    %162 = vmatpush1.msra.mxu0 0.0
    %163 = vmatprep.subr.mxu0 0.0
    %164 = vmatpush1.msra.mxu0 0.0
    %165 = vmatprep.subr.mxu0 0.0
    %166 = vmatpush1.msra.mxu0 0.0
    %167 = vmatprep.subr.mxu0 0.0
    %168 = vmatpush1.msra.mxu0 0.0
    %169 = vmatprep.subr.mxu0 0.0
    %170 = vmatpush1.msra.mxu0 0.0
    %171 = vmatprep.subr.mxu0 0.0
    %172 = vmatpush1.msra.mxu0 0.0
    %173 = vmatprep.subr.mxu0 0.0
    %174 = vmatpush1.msra.mxu0 0.0
    %175 = vmatprep.subr.mxu0 0.0
    %176 = vmatpush1.msra.mxu0 0.0
    %177 = vmatprep.subr.mxu0 0.0
    %178 = vmatpush1.msra.mxu0 0.0
    %179 = vmatprep.subr.mxu0 0.0
    %180 = vmatpush1.msra.mxu0 0.0
    %181 = vmatprep.subr.mxu0 0.0
    %182 = vmatpush1.msra.mxu0 0.0
    %183 = vmatprep.subr.mxu0 0.0
    %184 = vmatpush1.msra.mxu0 0.0
    %185 = vmatprep.subr.mxu0 0.0
    %186 = vmatpush1.msra.mxu0 0.0
    %187 = vmatprep.subr.mxu0 0.0
    %188 = vmatpush1.msra.mxu0 0.0
    %189 = vmatprep.subr.mxu0 0.0
    %190 = vmatpush1.msra.mxu0 0.0
    %191 = vmatprep.subr.mxu0 0.0
    %192 = vmatpush1.msra.mxu0 0.0
    %193 = vmatprep.subr.mxu0 0.0
    %194 = vmatpush1.msra.mxu0 0.0
    %195 = vmatprep.subr.mxu0 0.0
    %196 = vmatpush1.msra.mxu0 0.0
    %197 = vmatprep.subr.mxu0 0.0
    %198 = vmatpush1.msra.mxu0 0.0
    %199 = vmatprep.subr.mxu0 0.0
    %200 = vmatpush1.msra.mxu0 0.0
    %201 = vmatprep.subr.mxu0 0.0
    %202 = vmatpush1.msra.mxu0 0.0
    %203 = vmatprep.subr.mxu0 0.0
    %204 = vmatpush1.msra.mxu0 0.0
    %205 = vmatprep.subr.mxu0 0.0
    %206 = vmatpush1.msra.mxu0 0.0
    %207 = vmatprep.subr.mxu0 0.0
    %208 = vmatpush1.msra.mxu0 0.0
    %209 = vmatprep.subr.mxu0 0.0
    %210 = vmatpush1.msra.mxu0 0.0
    %211 = vmatprep.subr.mxu0 0.0
    %212 = vmatpush1.msra.mxu0 0.0
    %213 = vmatprep.subr.mxu0 0.0
    %214 = vmatpush1.msra.mxu0 0.0
    %215 = vmatprep.subr.mxu0 0.0
    %216 = vmatpush1.msra.mxu0 0.0
    %217 = vmatprep.mubr.f32.mxu0 0.0
    %218 = vmatmul.mubr.f32.gmra.mrb[0].mxu0 %v151
    %v219 = vpop.f32.mrb[0].mxu0
    %v220 = vadd.f32 %v146, %v219
    %v221 = vpop.f32.mrb[0].mxu0
    %v222 = vadd.f32 %v148, %v221
    %223 = vdwg.mxu0
    %v224 = vmul.f32 %v220, %v220
    %v225 = vmul.f32 %v222, %v222
    %v226 = vadd.f32 %v224, %v225
    %227 = vmax.xlane.f32.xlu0 %v226
    %v228 = vpop.xlane.xlu0 %227
    %v229 = vlaneseq
    %v230 = vand.u32 %v229, 127
    %vm231 = vcmp.ge.f32.partialorder %v226, %v228
    %v232 = vsel %vm231, %v230, 128
    %v233 = vand.u32 %v232, 65535
    %v234 = vshra.s32 %v232, 16
    %v235 = vcvt.s32.f32 %v233
    %v236 = vcvt.s32.f32 %v234
    %237 = vmin.xlane.f32.xlu0 %v236
    %v238 = vpop.xlane.xlu0 %237
    %vm239 = vcmp.eq.f32.partialorder %v236, %v238
    %v240 = vsel %vm239, %v235, inf
    %241 = vmin.xlane.f32.xlu0 %v240
    %v242 = vpop.xlane.xlu0 %241
    %v243 = vcvt.f32.s32 %v242
    %v244 = vcvt.f32.s32 %v238
    %v245 = vshll.u32 %v244, 16
    %v246 = vadd.s32 %v245, %v243
    %v247 = vrsqrt.pop %v228
    %v248 = vmul.f32 %v228, %v247
    %vm249 = vcmp.eq.f32.partialorder %v228, inf
    %v250 = vsel %vm249, %v228, %v248
    %vm251 = vcmp.eq.f32.partialorder %v228, 0.0
    %v252 = vand.u32 %v228, 2147483648
    %v253 = vsel %vm251, %v252, %v250
    %v254 = vmul.f32 %v253, 0.35355338
    %vm255 = vcmp.eq.s32.totalorder %v230, %v246
    %v256 = vsel %vm255, 1, 0
    %v257 = vcvt.s32.f32 %v256
    %v258 = vld [vmem:[#allocation8] sm:$0xff]
    %v259 = vld [vmem:[#allocation8 + $0x8] sm:$0xff]
    %v260 = vld [vmem:[#allocation8 + $0x10] sm:$0xff]
    %v261 = vld [vmem:[#allocation8 + $0x18] sm:$0xff]
    %v262 = vld [vmem:[#allocation8 + $0x20] sm:$0xff]
    %v263 = vld [vmem:[#allocation8 + $0x28] sm:$0xff]
    %v264 = vld [vmem:[#allocation8 + $0x30] sm:$0xff]
    %v265 = vld [vmem:[#allocation8 + $0x38] sm:$0xff]
    %v266 = vld [vmem:[#allocation8 + $0x40] sm:$0xff]
    %v267 = vld [vmem:[#allocation8 + $0x48] sm:$0xff]
    %v268 = vld [vmem:[#allocation8 + $0x50] sm:$0xff]
    %v269 = vld [vmem:[#allocation8 + $0x58] sm:$0xff]
    %v270 = vld [vmem:[#allocation8 + $0x60] sm:$0xff]
    %v271 = vld [vmem:[#allocation8 + $0x68] sm:$0xff]
    %v272 = vld [vmem:[#allocation8 + $0x70] sm:$0xff]
    %v273 = vld [vmem:[#allocation8 + $0x78] sm:$0xff]
    %274 = vmatprep.subr.mxu0 0.0
    %275 = vmatpush1.msra.mxu0 %v258
    %276 = vmatprep.subr.mxu0 0.0
    %277 = vmatpush1.msra.mxu0 %v259
    %278 = vmatprep.subr.mxu0 0.0
    %279 = vmatpush1.msra.mxu0 %v260
    %280 = vmatprep.subr.mxu0 0.0
    %281 = vmatpush1.msra.mxu0 %v261
    %282 = vmatprep.subr.mxu0 0.0
    %283 = vmatpush1.msra.mxu0 %v262
    %284 = vmatprep.subr.mxu0 0.0
    %285 = vmatpush1.msra.mxu0 %v263
    %286 = vmatprep.subr.mxu0 0.0
    %287 = vmatpush1.msra.mxu0 %v264
    %288 = vmatprep.subr.mxu0 0.0
    %289 = vmatpush1.msra.mxu0 %v265
    %290 = vmatprep.subr.mxu0 0.0
    %291 = vmatpush1.msra.mxu0 %v266
    %292 = vmatprep.subr.mxu0 0.0
    %293 = vmatpush1.msra.mxu0 %v267
    %294 = vmatprep.subr.mxu0 0.0
    %295 = vmatpush1.msra.mxu0 %v268
    %296 = vmatprep.subr.mxu0 0.0
    %297 = vmatpush1.msra.mxu0 %v269
    %298 = vmatprep.subr.mxu0 0.0
    %299 = vmatpush1.msra.mxu0 %v270
    %300 = vmatprep.subr.mxu0 0.0
    %301 = vmatpush1.msra.mxu0 %v271
    %302 = vmatprep.subr.mxu0 0.0
    %303 = vmatpush1.msra.mxu0 %v272
    %304 = vmatprep.subr.mxu0 0.0
    %305 = vmatpush1.msra.mxu0 %v273
    %306 = vmatprep.subr.mxu0 0.0
    %307 = vmatpush1.msra.mxu0 0.0
    %308 = vmatprep.subr.mxu0 0.0
    %309 = vmatpush1.msra.mxu0 0.0
    %310 = vmatprep.subr.mxu0 0.0
    %311 = vmatpush1.msra.mxu0 0.0
    %312 = vmatprep.subr.mxu0 0.0
    %313 = vmatpush1.msra.mxu0 0.0
    %314 = vmatprep.subr.mxu0 0.0
    %315 = vmatpush1.msra.mxu0 0.0
    %316 = vmatprep.subr.mxu0 0.0
    %317 = vmatpush1.msra.mxu0 0.0
    %318 = vmatprep.subr.mxu0 0.0
    %319 = vmatpush1.msra.mxu0 0.0
    %320 = vmatprep.subr.mxu0 0.0
    %321 = vmatpush1.msra.mxu0 0.0
    %322 = vmatprep.subr.mxu0 0.0
    %323 = vmatpush1.msra.mxu0 0.0
    %324 = vmatprep.subr.mxu0 0.0
    %325 = vmatpush1.msra.mxu0 0.0
    %326 = vmatprep.subr.mxu0 0.0
    %327 = vmatpush1.msra.mxu0 0.0
    %328 = vmatprep.subr.mxu0 0.0
    %329 = vmatpush1.msra.mxu0 0.0
    %330 = vmatprep.subr.mxu0 0.0
    %331 = vmatpush1.msra.mxu0 0.0
    %332 = vmatprep.subr.mxu0 0.0
    %333 = vmatpush1.msra.mxu0 0.0
    %334 = vmatprep.subr.mxu0 0.0
    %335 = vmatpush1.msra.mxu0 0.0
    %336 = vmatprep.subr.mxu0 0.0
    %337 = vmatpush1.msra.mxu0 0.0
    %338 = vmatprep.mubr.f32.mxu0 0.0
    %339 = vmatmul.mubr.f32.gmra.mrb[0].mxu0 %v257
    %v340 = vpop.f32.mrb[0].mxu0
    %v341 = vadd.f32 0.0, %v340
    %v342 = vpop.f32.mrb[0].mxu0
    %343 = vdwg.mxu0
    %vm344 = vcmp.eq.s32.totalorder %v230, 16
    %v345 = vsel %vm344, %v254, %v341
    %vm346 = vcmp.eq.s32.totalorder %v230, 17
    %v347 = vcvt.s32.f32 %v246
    %v348 = vsel %vm346, %v347, %v345
    %349 = vst [vmem:[#allocation10] sm:$0xff] %v348
    // Predicated region
    $region34: #{tpu_custom_call.1} parent=1 // pred_check
      _
    $region35: #{tpu_custom_call.1} parent=1 // pred_check_branch
      %351 = sbr.rel (0) target = $region37
    $region36: #{tpu_custom_call.1} parent=1 // pred_region
      %s353 = ssub.s32 128, 128
      %354 = vsyncadd [#allocation4], %s353
      %s356 = sshll.u32 [#allocation10], 4
      %s357 = int_to_ptr.vmem [resolvable:$true] %s356
      %359 = dma.vmem_to_hbm [thread:$0]  %s357, 128, %s4, [#allocation4]
    $region37: #{tpu_custom_call.1} parent=1 // pred_fallthru
      _
    // Predicated region
    $region38: #{tpu_custom_call.1} parent=1 // pred_check
      _
    $region39: #{tpu_custom_call.1} parent=1 // pred_check_branch
      %361 = sbr.rel (0) target = $region41
    $region40: #{tpu_custom_call.1} parent=1 // pred_region
      %362 = dma.done [#allocation4], 128
    $region41: #{tpu_custom_call.1} parent=1 // pred_fallthru
      _
    %363 = vsyncpa [#allocation3], 1
    %364 = vsyncpa [#allocation6], 1
    %365 = vsyncpa [#allocation9], 1
    %366 = vsyncpa [#allocation4], 1

</llo_original>
